<compile_context>
chip_gen: v6e
topology: v6e:2x2x1
jax: 0.10.0
libtpu: 0.0.40
codegen_flags: <defaults>
</compile_context>

<pallas_src>
from functools import partial

import jax
import jax.numpy as jnp
from jax.experimental import pallas as pl
from jax.experimental.pallas import tpu as pltpu


def _concat_fusion_kernel(d_s, s_ref, v_ref, o_ref):
    # Two full-tile VMEM copies into disjoint lane ranges of the output tile.
    # Static slice offsets; if d_s is a multiple of 128 both stores are
    # unmasked full-vreg stores.
    o_ref[:, :d_s] = s_ref[...]
    o_ref[:, d_s:] = v_ref[...]


def concat_fusion(
    s_emb: jax.Array,
    v_emb: jax.Array,
    *,
    vmem_budget_bytes: int = 16 * 1024 * 1024,
) -> jax.Array:
    """Pallas equivalent of ConcatFusionOp.forward: concat([s_emb, v_emb], -1)."""
    assert s_emb.ndim == 2 and v_emb.ndim == 2, "expected (batch, d) embeddings"
    assert s_emb.shape[0] == v_emb.shape[0], "batch dims must match"
    assert s_emb.dtype == v_emb.dtype, "dtypes must match"

    B, d_s = s_emb.shape
    _, d_v = v_emb.shape
    d_out = d_s + d_v
    dtype = s_emb.dtype
    itemsize = jnp.dtype(dtype).itemsize

    # Dtype-aware sublane granularity (packed rows travel in pairs/quads).
    sub = {4: 8, 2: 16, 1: 32}.get(itemsize, 8)

    # Per grid step we hold (double-buffered) both input tiles + the output
    # tile in VMEM: 2 buffers * (d_s + d_v + d_out) = 4 * d_out bytes per row.
    bytes_per_row = 4 * d_out * itemsize
    tb = (vmem_budget_bytes // bytes_per_row) // sub * sub
    tb = max(tb, sub)

    if B <= tb:
        if B > sub:
            # Split into >= 2 similar-size steps so v7x's two TensorCores both
            # get work; keep the tile sublane-aligned (ragged last block is
            # handled by Pallas).
            half = -(-B // 2)
            tb = max(sub, -(-half // sub) * sub)
            if tb >= B:
                tb = B
        else:
            # Tiny batch: one block whose sublane dim equals the full dim.
            tb = B

    grid = (pl.cdiv(B, tb),)

    return pl.pallas_call(
        partial(_concat_fusion_kernel, d_s),
        out_shape=jax.ShapeDtypeStruct((B, d_out), dtype),
        grid_spec=pltpu.PrefetchScalarGridSpec(
            num_scalar_prefetch=0,
            grid=grid,
            in_specs=[
                pl.BlockSpec((tb, d_s), lambda i: (i, 0)),
                pl.BlockSpec((tb, d_v), lambda i: (i, 0)),
            ],
            out_specs=pl.BlockSpec((tb, d_out), lambda i: (i, 0)),
        ),
        compiler_params=pltpu.CompilerParams(
            dimension_semantics=("parallel",),
            # Safe on every generation: well under v7x's 64 MiB physical VMEM
            # and leaves headroom for Mosaic internals on v5e/v6e.
            vmem_limit_bytes=32 * 1024 * 1024,
        ),
    )(s_emb, v_emb)


if __name__ == "__main__":
    # ConcatFusionOp(d_s_emb, d_v_emb, d_f) has no parameters; forward just
    # concatenates along the last dim. Small, lane-friendly shapes.
    batch, d_s_emb, d_v_emb = 8, 128, 256

    key = jax.random.PRNGKey(0)
    k_s, k_v = jax.random.split(key)
    s_emb = jax.random.normal(k_s, (batch, d_s_emb), dtype=jnp.float32)
    v_emb = jax.random.normal(k_v, (batch, d_v_emb), dtype=jnp.float32)

    out = concat_fusion(s_emb, v_emb)
    jax.block_until_ready(out)

    # Correctness check against the pure-JAX reference.
    ref = jnp.concatenate([s_emb, v_emb], axis=-1)
    assert out.shape == ref.shape and out.dtype == ref.dtype
    assert jnp.array_equal(out, ref), "mismatch vs reference"

    print("KERNEL_OK")
</pallas_src>

<mosaic_0001>
module attributes {stable_mosaic.version = 11 : i64} {
  func.func @_concat_fusion_kernel(%arg0: i32, %arg1: memref<8x128xf32, #tpu.memory_space<vmem>>, %arg2: memref<8x256xf32, #tpu.memory_space<vmem>>, %arg3: memref<8x384xf32, #tpu.memory_space<vmem>>) attributes {dimension_semantics = [#tpu.dimension_semantics<parallel>], iteration_bounds = array<i64: 1>, scalar_prefetch = 0 : i64, scratch_operands = 0 : i64, tpu.core_type = #tpu.core_type<tc>, window_params = [{transform_indices = @transform_0, window_bounds = array<i64: 8, 128>}, {transform_indices = @transform_1, window_bounds = array<i64: 8, 256>}, {transform_indices = @transform_2, window_bounds = array<i64: 8, 384>}]} {
    %c0 = arith.constant 0 : index
    %c0_0 = arith.constant 0 : index
    %0 = vector.load %arg1[%c0, %c0_0] : memref<8x128xf32, #tpu.memory_space<vmem>>, vector<8x128xf32>
    %c0_1 = arith.constant 0 : index
    %c0_2 = arith.constant 0 : index
    %1 = vector.load %arg3[%c0_1, %c0_2] : memref<8x384xf32, #tpu.memory_space<vmem>>, vector<8x128xf32>
    tpu.vector_store %arg3[%c0_1, %c0_2], %0 {strides = array<i32>} : memref<8x384xf32, #tpu.memory_space<vmem>>, vector<8x128xf32>,
    %c0_3 = arith.constant 0 : index
    %c0_4 = arith.constant 0 : index
    %2 = vector.load %arg2[%c0_3, %c0_4] : memref<8x256xf32, #tpu.memory_space<vmem>>, vector<8x256xf32>
    %c0_5 = arith.constant 0 : index
    %c128 = arith.constant 128 : index
    %3 = vector.load %arg3[%c0_5, %c128] : memref<8x384xf32, #tpu.memory_space<vmem>>, vector<8x256xf32>
    tpu.vector_store %arg3[%c0_5, %c128], %2 {strides = array<i32>} : memref<8x384xf32, #tpu.memory_space<vmem>>, vector<8x256xf32>,
    return
  }
  func.func @transform_0(%arg0: i32) -> (i32, i32) {
    %c0_i32 = arith.constant 0 : i32
    %c0_i32_0 = arith.constant 0 : i32
    return %arg0, %c0_i32 : i32, i32
  }
  func.func @transform_1(%arg0: i32) -> (i32, i32) {
    %c0_i32 = arith.constant 0 : i32
    %c0_i32_0 = arith.constant 0 : i32
    return %arg0, %c0_i32 : i32, i32
  }
  func.func @transform_2(%arg0: i32) -> (i32, i32) {
    %c0_i32 = arith.constant 0 : i32
    %c0_i32_0 = arith.constant 0 : i32
    return %arg0, %c0_i32 : i32, i32
  }
}

</mosaic_0001>

<llo_original>
// kernel: tpu_custom_call.1
$region0: #{tpu_custom_call.1}
  #allocation0 [shape = 'u32[]', space=smem, size = 0x4, offset = 0x4, fixed_abs, tag = 'smem constant byte address 0x4 - core index']
  #allocation1 [shape = 'u32[144,128]{1,0:T(1,128)}', space=vmem, size = 0x12000, scoped, tag = 'internal scratch']
  %s0 = inlined_call_operand.hbm [shape: f32[8,128], index: 0, kind: input, shape index: {}]
  %s1 = inlined_call_operand.hbm [shape: f32[8,256], index: 1, kind: input, shape index: {}]
  %s2 = inlined_call_operand.hbm [shape: f32[8,384], index: 2, kind: output, shape index: {}]
  %s3 = sld [smem:[#allocation0]]
  $region26: #{tpu_custom_call.1} parent=0
    _
  %s5 = ssub.s32 1, %s3
  %s6 = scalar_select 0, %s5, %s3
  $region1: #{tpu_custom_call.1} parent=0
    #allocation2 [shape = 'u8[4096]{0}', space=vmem, size = 0x1000, scoped, tag = 'input window, operand 0, single buffered']
    #allocation3 [shape = 's32[1]{0}', space=sflag, size = 0x4, scoped, tag = 'scoped memory for tpu_custom_call.1']
    #allocation4 [shape = 's32[1]{0}', space=sflag, size = 0x4, scoped, tag = 'scoped memory for tpu_custom_call.1']
    #allocation5 [shape = 'u8[8192]{0}', space=vmem, size = 0x2000, scoped, tag = 'input window, operand 1, single buffered']
    #allocation6 [shape = 's32[1]{0}', space=sflag, size = 0x4, scoped, tag = 'scoped memory for tpu_custom_call.1']
    #allocation7 [shape = 'u8[12288]{0}', space=vmem, size = 0x3000, scoped, tag = 'output window, operand 0, single buffered']
    %7 = vsyncpa [#allocation3], 0
    %8 = vsyncpa [#allocation6], 0
    %9 = vsyncpa [#allocation4], 0
    // Predicated region
    $region2: #{tpu_custom_call.1} parent=1 // pred_check
      _
    $region3: #{tpu_custom_call.1} parent=1 // pred_check_branch
      %11 = sbr.rel (0) target = $region5
    $region4: #{tpu_custom_call.1} parent=1 // pred_region
      %s13 = ssub.s32 128, 128
      %14 = vsyncadd [#allocation3], %s13
      %s16 = sshll.u32 [#allocation2], 4
      %s17 = int_to_ptr.vmem [resolvable:$true] %s16
      %19 = dma.hbm_to_vmem [thread:$0]  %s0, 128, %s17, [#allocation3]
    $region5: #{tpu_custom_call.1} parent=1 // pred_fallthru
      _
    // Predicated region
    $region6: #{tpu_custom_call.1} parent=1 // pred_check
      _
    $region7: #{tpu_custom_call.1} parent=1 // pred_check_branch
      %21 = sbr.rel (0) target = $region9
    $region8: #{tpu_custom_call.1} parent=1 // pred_region
      %s23 = ssub.s32 256, 256
      %24 = vsyncadd [#allocation6], %s23
      %s26 = sshll.u32 [#allocation5], 4
      %s27 = int_to_ptr.vmem [resolvable:$true] %s26
      %29 = dma.hbm_to_vmem [thread:$0]  %s1, 256, %s27, [#allocation6]
    $region9: #{tpu_custom_call.1} parent=1 // pred_fallthru
      _
    // Predicated region
    $region10: #{tpu_custom_call.1} parent=1 // pred_check
      _
    $region11: #{tpu_custom_call.1} parent=1 // pred_check_branch
      %31 = sbr.rel (0) target = $region13
    $region12: #{tpu_custom_call.1} parent=1 // pred_region
      %32 = dma.done [#allocation3], 128
    $region13: #{tpu_custom_call.1} parent=1 // pred_fallthru
      _
    // Predicated region
    $region14: #{tpu_custom_call.1} parent=1 // pred_check
      _
    $region15: #{tpu_custom_call.1} parent=1 // pred_check_branch
      %34 = sbr.rel (0) target = $region17
    $region16: #{tpu_custom_call.1} parent=1 // pred_region
      %35 = dma.done [#allocation6], 256
    $region17: #{tpu_custom_call.1} parent=1 // pred_fallthru
      _
    %v36 = vld [vmem:[#allocation2] sm:$0xff]
    %37 = vst [vmem:[#allocation7] sm:$0xff] %v36
    %v38 = vld [vmem:[#allocation5] sm:$0xff]
    %v39 = vld [vmem:[#allocation5 + $0x8] sm:$0xff]
    %40 = vst [vmem:[#allocation7 + $0x8] sm:$0xff] %v38
    %41 = vst [vmem:[#allocation7 + $0x10] sm:$0xff] %v39
    // Predicated region
    $region18: #{tpu_custom_call.1} parent=1 // pred_check
      _
    $region19: #{tpu_custom_call.1} parent=1 // pred_check_branch
      %43 = sbr.rel (0) target = $region21
    $region20: #{tpu_custom_call.1} parent=1 // pred_region
      %s45 = ssub.s32 384, 384
      %46 = vsyncadd [#allocation4], %s45
      %s48 = sshll.u32 [#allocation7], 4
      %s49 = int_to_ptr.vmem [resolvable:$true] %s48
      %51 = dma.vmem_to_hbm [thread:$0]  %s49, 384, %s2, [#allocation4]
    $region21: #{tpu_custom_call.1} parent=1 // pred_fallthru
      _
    // Predicated region
    $region22: #{tpu_custom_call.1} parent=1 // pred_check
      _
    $region23: #{tpu_custom_call.1} parent=1 // pred_check_branch
      %53 = sbr.rel (0) target = $region25
    $region24: #{tpu_custom_call.1} parent=1 // pred_region
      %54 = dma.done [#allocation4], 384
    $region25: #{tpu_custom_call.1} parent=1 // pred_fallthru
      _
    %55 = vsyncpa [#allocation3], 1
    %56 = vsyncpa [#allocation6], 1
    %57 = vsyncpa [#allocation4], 1

</llo_original>
